<compile_context>
chip_gen: v7x
topology: tpu7x:2x2x1
jax: 0.10.0
libtpu: 0.0.40
codegen_flags: <defaults>
</compile_context>

<pallas_src>
import jax
import jax.numpy as jnp
from jax.experimental import pallas as pl
from jax.experimental.pallas import tpu as pltpu  # noqa: F401  (used when scaled up)

LANE = 128          # TPU lane width: pad hidden/class dims so loads/stores are lane-dense.
SUBLANE = 8         # f32 sublane count: pad the batch rows of the output tile.
NEG_INF = -1e30     # pad-class bias; exp(pad - max) underflows to exactly 0 in f32.


def _multi_window_kernel(x_ref, w1p_ref, b1p_ref, avg_ref, w2p_ref, b2p_ref, o_ref):
    # x_ref: (B*K, D), batch-major / window-minor (transpose-free flatten of (B,K,C,T)).
    # One MXU matmul covers all K windows at once: (B*K, D) @ (D, Hp).  Hp is a
    # multiple of 128, so the bias-add / ReLU below run on unmasked vregs.
    h = jnp.dot(x_ref[...], w1p_ref[...], preferred_element_type=jnp.float32)
    h = jnp.maximum(h + b1p_ref[...], 0.0)                       # (B*K, Hp) ReLU features

    # Mean over the K windows of each batch element: a tiny constant (Bp, B*K)
    # averaging matrix (precomputed at weight-load time, 1/K folded in).  The
    # Bp >= 8 rows make feat/logits sublane-full.
    feat = jnp.dot(avg_ref[...], h, preferred_element_type=jnp.float32)   # (Bp, Hp)

    # Final linear into a lane-dense padded-class tile; padded lanes carry a
    # -1e30 bias so they vanish under the softmax.  Padded Hp rows of w2p are 0.
    logits = jnp.dot(feat, w2p_ref[...],
                     preferred_element_type=jnp.float32) + b2p_ref[...]   # (Bp, n_pad)
    m = jnp.max(logits, axis=-1, keepdims=True)                  # softmax(dim=-1)
    e = jnp.exp(logits - m)
    inv = pl.reciprocal(jnp.sum(e, axis=-1, keepdims=True), approx=True)  # EUP slot
    o_ref[...] = e * inv                                         # (8, 128) unmasked store


def prepare_params(w1, b1, w2, b2, *, B, K):
    """One-time (weight-load time) padding / constant construction.

    Keeps all padding off the per-call inference path, per perf review.
    """
    D, H = w1.shape
    n_classes = w2.shape[1]
    h_pad = LANE * pl.cdiv(H, LANE)                 # lane-dense hidden dim
    n_pad = LANE * pl.cdiv(n_classes, LANE)         # lane-dense class dim
    b_pad = SUBLANE * pl.cdiv(B, SUBLANE)           # sublane-full output rows

    # Hidden-dim padding: zero columns in W1, zero bias entries, zero rows in W2.
    w1p = jnp.zeros((D, h_pad), jnp.float32).at[:, :H].set(w1.astype(jnp.float32))
    b1p = jnp.zeros((1, h_pad), jnp.float32).at[0, :H].set(b1.astype(jnp.float32))
    w2p = jnp.zeros((h_pad, n_pad), jnp.float32).at[:H, :n_classes].set(
        w2.astype(jnp.float32))
    b2p = jnp.full((1, n_pad), NEG_INF, jnp.float32).at[0, :n_classes].set(
        b2.astype(jnp.float32))

    # Constant averaging matrix: row b has 1/K over columns [b*K, (b+1)*K); the
    # sublane-padding rows (b >= B) are all zero and are sliced off by the wrapper.
    rows = jax.lax.broadcasted_iota(jnp.int32, (b_pad, B * K), 0)
    cols = jax.lax.broadcasted_iota(jnp.int32, (b_pad, B * K), 1)
    lo = rows * K
    avg = jnp.where((rows < B) & (cols >= lo) & (cols < lo + K),
                    1.0 / K, 0.0).astype(jnp.float32)

    return dict(w1p=w1p, b1p=b1p, avg=avg, w2p=w2p, b2p=b2p,
                n_classes=n_classes, b_pad=b_pad, n_pad=n_pad)


def multi_window_forward(x_bkct, params):
    """x_bkct: (B, K, C, T) float32.  Returns softmax probs (B, n_classes)."""
    B, K, C, T = x_bkct.shape
    D = C * T

    # Transpose-free, contiguous flatten: (B, K, C, T) -> (B*K, D). No HBM copy.
    x_flat = x_bkct.reshape(B * K, D).astype(jnp.float32)

    out_padded = pl.pallas_call(
        _multi_window_kernel,
        out_shape=jax.ShapeDtypeStruct((params["b_pad"], params["n_pad"]), jnp.float32),
        # No grid / no BlockSpecs: every operand (a few KiB total) is resident in
        # VMEM for a single kernel invocation -- no per-step pipeline overhead.
        # At production sizes: add a leading "parallel" batch grid axis (v7x 2 TCs)
        # and bf16 MXU inputs on v6e/v7x.
    )(x_flat, params["w1p"], params["b1p"], params["avg"],
      params["w2p"], params["b2p"])

    return out_padded[:B, :params["n_classes"]]


def _reference_forward(x_bkct, w1, b1, w2, b2):
    """Pure-JAX reference mirroring the PyTorch forward (variant 1.2)."""
    B, K, C, T = x_bkct.shape
    x = jnp.transpose(x_bkct, (1, 0, 2, 3)).reshape(K, B, C * T)
    feats = jnp.maximum(jnp.einsum("kbd,dh->kbh", x, w1) + b1, 0.0)
    res = jnp.mean(feats, axis=0)                 # mean over k windows
    logits = res @ w2 + b2                        # final
    return jax.nn.softmax(logits, axis=-1)        # final_act = Softmax(dim=-1)


if __name__ == "__main__":
    # Small shapes consistent with the module:
    #   batch=2, k=4 windows, channels=4, seq=16  -> D = 64, hidden=32, classes=20
    B, K, C, T = 2, 4, 4, 16
    D, H, N_CLASSES = C * T, 32, 20

    key = jax.random.PRNGKey(0)
    kx, kw1, kb1, kw2, kb2 = jax.random.split(key, 5)

    x = jax.random.normal(kx, (B, K, C, T), dtype=jnp.float32)
    w1 = jax.random.normal(kw1, (D, H), dtype=jnp.float32) * (1.0 / jnp.sqrt(D))
    b1 = jax.random.normal(kb1, (H,), dtype=jnp.float32) * 0.01
    w2 = jax.random.normal(kw2, (H, N_CLASSES), dtype=jnp.float32) * (1.0 / jnp.sqrt(H))
    b2 = jax.random.normal(kb2, (N_CLASSES,), dtype=jnp.float32) * 0.01

    # Weight-load-time preparation (padding + averaging constant), done once.
    params = prepare_params(w1, b1, w2, b2, B=B, K=K)
    params = jax.tree_util.tree_map(
        lambda a: jax.block_until_ready(a) if isinstance(a, jax.Array) else a, params)

    out = multi_window_forward(x, params)
    out = jax.block_until_ready(out)

    ref = _reference_forward(x, w1, b1, w2, b2)
    assert out.shape == (B, N_CLASSES)
    # Tolerance covers the ~2^-12 relative error of the approx EUP reciprocal
    # used for the softmax denominator.
    assert jnp.allclose(out, ref, atol=2e-3, rtol=2e-3), "mismatch vs reference"
    # TODO(synk): variants 2.x-7.x (weighted / attention / RNN aggregation) are not
    # used by the default config (variant=1.2) and are not implemented here.

    print("KERNEL_OK")
</pallas_src>

<mosaic_0001>
module attributes {stable_mosaic.version = 11 : i64} {
  func.func @_multi_window_kernel(%arg0: memref<8x64xf32, #tpu.memory_space<vmem>>, %arg1: memref<64x128xf32, #tpu.memory_space<vmem>>, %arg2: memref<1x128xf32, #tpu.memory_space<vmem>>, %arg3: memref<8x8xf32, #tpu.memory_space<vmem>>, %arg4: memref<128x128xf32, #tpu.memory_space<vmem>>, %arg5: memref<1x128xf32, #tpu.memory_space<vmem>>, %arg6: memref<8x128xf32, #tpu.memory_space<vmem>>) attributes {dimension_semantics = [], scalar_prefetch = 0 : i64, scratch_operands = 0 : i64, tpu.core_type = #tpu.core_type<tc>} {
    %c0 = arith.constant 0 : index
    %c0_0 = arith.constant 0 : index
    %0 = vector.load %arg0[%c0, %c0_0] : memref<8x64xf32, #tpu.memory_space<vmem>>, vector<8x64xf32>
    %c0_1 = arith.constant 0 : index
    %c0_2 = arith.constant 0 : index
    %1 = vector.load %arg1[%c0_1, %c0_2] : memref<64x128xf32, #tpu.memory_space<vmem>>, vector<64x128xf32>
    %cst = arith.constant dense<0.000000e+00> : vector<8x128xf32>
    %2 = tpu.matmul %0, %1, %cst {dimension_numbers = #tpu.dot_dimension_numbers<[1], [0], [0], [1], [0, 0, 1, 1], [], []>} : vector<8x64xf32>, vector<64x128xf32>, vector<8x128xf32> -> vector<8x128xf32>
    %c0_3 = arith.constant 0 : index
    %c0_4 = arith.constant 0 : index
    %3 = vector.load %arg2[%c0_3, %c0_4] : memref<1x128xf32, #tpu.memory_space<vmem>>, vector<1x128xf32>
    %4 = vector.broadcast %3 : vector<1x128xf32> to vector<8x128xf32>
    %5 = arith.addf %2, %4 : vector<8x128xf32>
    %cst_5 = arith.constant 0.000000e+00 : f32
    %6 = vector.broadcast %cst_5 : f32 to vector<8x128xf32>
    %7 = arith.maximumf %5, %6 : vector<8x128xf32>
    %c0_6 = arith.constant 0 : index
    %c0_7 = arith.constant 0 : index
    %8 = vector.load %arg3[%c0_6, %c0_7] : memref<8x8xf32, #tpu.memory_space<vmem>>, vector<8x8xf32>
    %cst_8 = arith.constant dense<0.000000e+00> : vector<8x128xf32>
    %9 = tpu.matmul %8, %7, %cst_8 {dimension_numbers = #tpu.dot_dimension_numbers<[1], [0], [0], [1], [0, 0, 1, 1], [], []>} : vector<8x8xf32>, vector<8x128xf32>, vector<8x128xf32> -> vector<8x128xf32>
    %c0_9 = arith.constant 0 : index
    %c0_10 = arith.constant 0 : index
    %10 = vector.load %arg4[%c0_9, %c0_10] : memref<128x128xf32, #tpu.memory_space<vmem>>, vector<128x128xf32>
    %cst_11 = arith.constant dense<0.000000e+00> : vector<8x128xf32>
    %11 = tpu.matmul %9, %10, %cst_11 {dimension_numbers = #tpu.dot_dimension_numbers<[1], [0], [0], [1], [0, 0, 1, 1], [], []>} : vector<8x128xf32>, vector<128x128xf32>, vector<8x128xf32> -> vector<8x128xf32>
    %c0_12 = arith.constant 0 : index
    %c0_13 = arith.constant 0 : index
    %12 = vector.load %arg5[%c0_12, %c0_13] : memref<1x128xf32, #tpu.memory_space<vmem>>, vector<1x128xf32>
    %13 = vector.broadcast %12 : vector<1x128xf32> to vector<8x128xf32>
    %14 = arith.addf %11, %13 : vector<8x128xf32>
    %cst_14 = arith.constant dense<0xFF800000> : vector<8xf32>
    %15 = vector.multi_reduction <maximumf>, %14, %cst_14 [1] : vector<8x128xf32> to vector<8xf32>
    %16 = vector.shape_cast %15 : vector<8xf32> to vector<8x1xf32>
    %17 = vector.broadcast %16 : vector<8x1xf32> to vector<8x128xf32>
    %18 = arith.subf %14, %17 : vector<8x128xf32>
    %19 = math.exp %18 : vector<8x128xf32>
    %cst_15 = arith.constant dense<0.000000e+00> : vector<8xf32>
    %20 = vector.multi_reduction <add>, %19, %cst_15 [1] : vector<8x128xf32> to vector<8xf32>
    %21 = vector.shape_cast %20 : vector<8xf32> to vector<8x1xf32>
    %22 = tpu.reciprocal %21 {approx = true} : vector<8x1xf32> -> vector<8x1xf32>
    %23 = vector.broadcast %22 : vector<8x1xf32> to vector<8x128xf32>
    %24 = arith.mulf %19, %23 : vector<8x128xf32>
    %c0_16 = arith.constant 0 : index
    %c0_17 = arith.constant 0 : index
    %25 = vector.load %arg6[%c0_16, %c0_17] : memref<8x128xf32, #tpu.memory_space<vmem>>, vector<8x128xf32>
    tpu.vector_store %arg6[%c0_16, %c0_17], %24 {strides = array<i32>} : memref<8x128xf32, #tpu.memory_space<vmem>>, vector<8x128xf32>,
    return
  }
}

</mosaic_0001>

<llo_original>
// kernel: tpu_custom_call.1
$region0: #{tpu_custom_call.1}
  #allocation0 [shape = 'u32[]', space=smem, size = 0x4, offset = 0x4, fixed_abs, tag = 'smem constant byte address 0x4 - core index']
  #allocation1 [shape = 'u32[144,128]{1,0:T(1,128)}', space=vmem, size = 0x12000, scoped, tag = 'internal scratch']
  %s0 = inlined_call_operand.hbm [shape: f32[8,64], index: 0, kind: input, shape index: {}]
  %s1 = inlined_call_operand.hbm [shape: f32[64,128], index: 1, kind: input, shape index: {}]
  %s2 = inlined_call_operand.vmem [shape: f32[1,128], index: 2, kind: input, shape index: {}]
  %s3 = inlined_call_operand.vmem [shape: f32[8,8], index: 3, kind: input, shape index: {}]
  %s4 = inlined_call_operand.hbm [shape: f32[128,128], index: 4, kind: input, shape index: {}]
  %s5 = inlined_call_operand.vmem [shape: f32[1,128], index: 5, kind: input, shape index: {}]
  %s6 = inlined_call_operand.hbm [shape: f32[8,128], index: 6, kind: output, shape index: {}]
  %s7 = sld [smem:[#allocation0]]
  $region46: #{tpu_custom_call.1} parent=0
    _
  %s9 = ssub.s32 1, %s7
  %s10 = scalar_select 0, %s9, %s7
  $region1: #{tpu_custom_call.1} parent=0
    #allocation2 [shape = 'u8[4096]{0}', space=vmem, size = 0x1000, scoped, tag = 'input window, operand 0, single buffered']
    #allocation3 [shape = 's32[1]{0}', space=sflag, size = 0x4, scoped, tag = 'scoped memory for tpu_custom_call.1']
    #allocation4 [shape = 's32[1]{0}', space=sflag, size = 0x4, scoped, tag = 'scoped memory for tpu_custom_call.1']
    #allocation5 [shape = 'u8[32768]{0}', space=vmem, size = 0x8000, scoped, tag = 'input window, operand 1, single buffered']
    #allocation6 [shape = 's32[1]{0}', space=sflag, size = 0x4, scoped, tag = 'scoped memory for tpu_custom_call.1']
    #allocation7 [shape = 'u8[65536]{0}', space=vmem, size = 0x10000, scoped, tag = 'input window, operand 4, single buffered']
    #allocation8 [shape = 'u8[4096]{0}', space=vmem, size = 0x1000, scoped, tag = 'output window, operand 0, single buffered']
    %11 = vsyncpa [#allocation3], 0
    %12 = vsyncpa [#allocation6], 0
    %13 = vsyncpa [#allocation4], 0
    // Predicated region
    $region2: #{tpu_custom_call.1} parent=1 // pred_check
      _
    $region3: #{tpu_custom_call.1} parent=1 // pred_check_branch
      %15 = sbr.rel (0) target = $region5
    $region4: #{tpu_custom_call.1} parent=1 // pred_region
      %s17 = ssub.s32 128, 128
      %18 = vsyncadd [#allocation3], %s17
      %s20 = sshll.u32 [#allocation2], 4
      %s21 = int_to_ptr.vmem [resolvable:$true] %s20
      %23 = dma.hbm_to_vmem [thread:$0]  %s0, 128, %s21, [#allocation3]
    $region5: #{tpu_custom_call.1} parent=1 // pred_fallthru
      _
    // Predicated region
    $region6: #{tpu_custom_call.1} parent=1 // pred_check
      _
    $region7: #{tpu_custom_call.1} parent=1 // pred_check_branch
      %25 = sbr.rel (0) target = $region9
    $region8: #{tpu_custom_call.1} parent=1 // pred_region
      %s27 = ssub.s32 1024, 1024
      %28 = vsyncadd [#allocation6], %s27
      %s29 = sshll.u32 [#allocation5], 4
      %s30 = int_to_ptr.vmem [resolvable:$true] %s29
      %35 = dma.hbm_to_vmem [thread:$0]  %s1, 1024, %s30, [#allocation6], 128, 128, 8
    $region9: #{tpu_custom_call.1} parent=1 // pred_fallthru
      _
    // Predicated region
    $region10: #{tpu_custom_call.1} parent=1 // pred_check
      _
    $region11: #{tpu_custom_call.1} parent=1 // pred_check_branch
      %37 = sbr.rel (0) target = $region13
    $region12: #{tpu_custom_call.1} parent=1 // pred_region
      _
    $region13: #{tpu_custom_call.1} parent=1 // pred_fallthru
      _
    // Predicated region
    $region14: #{tpu_custom_call.1} parent=1 // pred_check
      _
    $region15: #{tpu_custom_call.1} parent=1 // pred_check_branch
      %39 = sbr.rel (0) target = $region17
    $region16: #{tpu_custom_call.1} parent=1 // pred_region
      _
    $region17: #{tpu_custom_call.1} parent=1 // pred_fallthru
      _
    // Predicated region
    $region18: #{tpu_custom_call.1} parent=1 // pred_check
      _
    $region19: #{tpu_custom_call.1} parent=1 // pred_check_branch
      %41 = sbr.rel (0) target = $region21
    $region20: #{tpu_custom_call.1} parent=1 // pred_region
      %s43 = ssub.s32 2048, 2048
      %44 = vsyncadd [#allocation6], %s43
      %s45 = sshll.u32 [#allocation7], 4
      %s46 = int_to_ptr.vmem [resolvable:$true] %s45
      %51 = dma.hbm_to_vmem [thread:$0]  %s4, 2048, %s46, [#allocation6], 128, 128, 8
    $region21: #{tpu_custom_call.1} parent=1 // pred_fallthru
      _
    // Predicated region
    $region22: #{tpu_custom_call.1} parent=1 // pred_check
      _
    $region23: #{tpu_custom_call.1} parent=1 // pred_check_branch
      %53 = sbr.rel (0) target = $region25
    $region24: #{tpu_custom_call.1} parent=1 // pred_region
      _
    $region25: #{tpu_custom_call.1} parent=1 // pred_fallthru
      _
    // Predicated region
    $region26: #{tpu_custom_call.1} parent=1 // pred_check
      _
    $region27: #{tpu_custom_call.1} parent=1 // pred_check_branch
      %55 = sbr.rel (0) target = $region29
    $region28: #{tpu_custom_call.1} parent=1 // pred_region
      %56 = dma.done [#allocation3], 128
    $region29: #{tpu_custom_call.1} parent=1 // pred_fallthru
      _
    // Predicated region
    $region30: #{tpu_custom_call.1} parent=1 // pred_check
      _
    $region31: #{tpu_custom_call.1} parent=1 // pred_check_branch
      %58 = sbr.rel (0) target = $region33
    $region32: #{tpu_custom_call.1} parent=1 // pred_region
      %59 = dma.done [#allocation6], 1024
    $region33: #{tpu_custom_call.1} parent=1 // pred_fallthru
      _
    // Predicated region
    $region34: #{tpu_custom_call.1} parent=1 // pred_check
      _
    $region35: #{tpu_custom_call.1} parent=1 // pred_check_branch
      %61 = sbr.rel (0) target = $region37
    $region36: #{tpu_custom_call.1} parent=1 // pred_region
      %62 = dma.done [#allocation6], 2048
    $region37: #{tpu_custom_call.1} parent=1 // pred_fallthru
      _
    %v63 = vld [vmem:[#allocation2] sm:$0xff]
    %v64 = vld [vmem:[#allocation5] sm:$0xff]
    %v65 = vld [vmem:[#allocation5 + $0x8] sm:$0xff]
    %v66 = vld [vmem:[#allocation5 + $0x10] sm:$0xff]
    %v67 = vld [vmem:[#allocation5 + $0x18] sm:$0xff]
    %v68 = vld [vmem:[#allocation5 + $0x20] sm:$0xff]
    %v69 = vld [vmem:[#allocation5 + $0x28] sm:$0xff]
    %v70 = vld [vmem:[#allocation5 + $0x30] sm:$0xff]
    %v71 = vld [vmem:[#allocation5 + $0x38] sm:$0xff]
    %v72 = vld [vmem:[%s2] sm:$0x1]
    %v74 = vlaneseq
    %v75 = vshrl.u32 %v74, 7
    %v76 = vsub.s32 0, %v75
    %v77 = vrot.slane %v72, %v76
    %vm79 = vcmask 523264
    %v81 = vsel %vm79, %v63, 0
    %83 = vmatprep.subr.mxu0 0.0
    %84 = vmatpush1.msra.mxu0 %v64
    %85 = vmatprep.subr.mxu0 0.0
    %86 = vmatpush1.msra.mxu0 %v65
    %87 = vmatprep.subr.mxu0 0.0
    %88 = vmatpush1.msra.mxu0 %v66
    %89 = vmatprep.subr.mxu0 0.0
    %90 = vmatpush1.msra.mxu0 %v67
    %91 = vmatprep.subr.mxu0 0.0
    %92 = vmatpush1.msra.mxu0 %v68
    %93 = vmatprep.subr.mxu0 0.0
    %94 = vmatpush1.msra.mxu0 %v69
    %95 = vmatprep.subr.mxu0 0.0
    %96 = vmatpush1.msra.mxu0 %v70
    %97 = vmatprep.subr.mxu0 0.0
    %98 = vmatpush1.msra.mxu0 %v71
    %99 = vmatprep.subr.mxu0 0.0
    %100 = vmatpush1.msra.mxu0 0.0
    %101 = vmatprep.subr.mxu0 0.0
    %102 = vmatpush1.msra.mxu0 0.0
    %103 = vmatprep.subr.mxu0 0.0
    %104 = vmatpush1.msra.mxu0 0.0
    %105 = vmatprep.subr.mxu0 0.0
    %106 = vmatpush1.msra.mxu0 0.0
    %107 = vmatprep.subr.mxu0 0.0
    %108 = vmatpush1.msra.mxu0 0.0
    %109 = vmatprep.subr.mxu0 0.0
    %110 = vmatpush1.msra.mxu0 0.0
    %111 = vmatprep.subr.mxu0 0.0
    %112 = vmatpush1.msra.mxu0 0.0
    %113 = vmatprep.subr.mxu0 0.0
    %114 = vmatpush1.msra.mxu0 0.0
    %115 = vmatprep.subr.mxu0 0.0
    %116 = vmatpush1.msra.mxu0 0.0
    %117 = vmatprep.subr.mxu0 0.0
    %118 = vmatpush1.msra.mxu0 0.0
    %119 = vmatprep.subr.mxu0 0.0
    %120 = vmatpush1.msra.mxu0 0.0
    %121 = vmatprep.subr.mxu0 0.0
    %122 = vmatpush1.msra.mxu0 0.0
    %123 = vmatprep.subr.mxu0 0.0
    %124 = vmatpush1.msra.mxu0 0.0
    %125 = vmatprep.subr.mxu0 0.0
    %126 = vmatpush1.msra.mxu0 0.0
    %127 = vmatprep.subr.mxu0 0.0
    %128 = vmatpush1.msra.mxu0 0.0
    %129 = vmatprep.subr.mxu0 0.0
    %130 = vmatpush1.msra.mxu0 0.0
    %131 = vmatprep.subr.mxu0 0.0
    %132 = vmatpush1.msra.mxu0 0.0
    %133 = vmatprep.subr.mxu0 0.0
    %134 = vmatpush1.msra.mxu0 0.0
    %135 = vmatprep.subr.mxu0 0.0
    %136 = vmatpush1.msra.mxu0 0.0
    %137 = vmatprep.subr.mxu0 0.0
    %138 = vmatpush1.msra.mxu0 0.0
    %139 = vmatprep.subr.mxu0 0.0
    %140 = vmatpush1.msra.mxu0 0.0
    %141 = vmatprep.subr.mxu0 0.0
    %142 = vmatpush1.msra.mxu0 0.0
    %143 = vmatprep.subr.mxu0 0.0
    %144 = vmatpush1.msra.mxu0 0.0
    %145 = vmatprep.subr.mxu0 0.0
    %146 = vmatpush1.msra.mxu0 0.0
    %147 = vmatprep.mubr.f32.mxu0 0.0
    %148 = vmatmul.mubr.f32.gmra.mrb[0].mxu0 %v81
    %v149 = vpop.f32.mrb[0].mxu0
    %v150 = vadd.f32 %v77, %v149
    %v151 = vpop.f32.mrb[0].mxu0
    %152 = vdwg.mxu0
    %v153 = vmax.f32 %v150, 0.0
    %v154 = vld [vmem:[%s3] sm:$0xff]
    %vm155 = vcmask 64512
    %v157 = vsel %vm155, %v154, 0
    %159 = vmatprep.subr.mxu0 0.0
    %160 = vmatpush1.msra.mxu0 %v153
    %161 = vmatprep.subr.mxu0 0.0
    %162 = vmatpush1.msra.mxu0 0.0
    %163 = vmatprep.subr.mxu0 0.0
    %164 = vmatpush1.msra.mxu0 0.0
    %165 = vmatprep.subr.mxu0 0.0
    %166 = vmatpush1.msra.mxu0 0.0
    %167 = vmatprep.subr.mxu0 0.0
    %168 = vmatpush1.msra.mxu0 0.0
    %169 = vmatprep.subr.mxu0 0.0
    %170 = vmatpush1.msra.mxu0 0.0
    %171 = vmatprep.subr.mxu0 0.0
    %172 = vmatpush1.msra.mxu0 0.0
    %173 = vmatprep.subr.mxu0 0.0
    %174 = vmatpush1.msra.mxu0 0.0
    %175 = vmatprep.subr.mxu0 0.0
    %176 = vmatpush1.msra.mxu0 0.0
    %177 = vmatprep.subr.mxu0 0.0
    %178 = vmatpush1.msra.mxu0 0.0
    %179 = vmatprep.subr.mxu0 0.0
    %180 = vmatpush1.msra.mxu0 0.0
    %181 = vmatprep.subr.mxu0 0.0
    %182 = vmatpush1.msra.mxu0 0.0
    %183 = vmatprep.subr.mxu0 0.0
    %184 = vmatpush1.msra.mxu0 0.0
    %185 = vmatprep.subr.mxu0 0.0
    %186 = vmatpush1.msra.mxu0 0.0
    %187 = vmatprep.subr.mxu0 0.0
    %188 = vmatpush1.msra.mxu0 0.0
    %189 = vmatprep.subr.mxu0 0.0
    %190 = vmatpush1.msra.mxu0 0.0
    %191 = vmatprep.subr.mxu0 0.0
    %192 = vmatpush1.msra.mxu0 0.0
    %193 = vmatprep.subr.mxu0 0.0
    %194 = vmatpush1.msra.mxu0 0.0
    %195 = vmatprep.subr.mxu0 0.0
    %196 = vmatpush1.msra.mxu0 0.0
    %197 = vmatprep.subr.mxu0 0.0
    %198 = vmatpush1.msra.mxu0 0.0
    %199 = vmatprep.subr.mxu0 0.0
    %200 = vmatpush1.msra.mxu0 0.0
    %201 = vmatprep.subr.mxu0 0.0
    %202 = vmatpush1.msra.mxu0 0.0
    %203 = vmatprep.subr.mxu0 0.0
    %204 = vmatpush1.msra.mxu0 0.0
    %205 = vmatprep.subr.mxu0 0.0
    %206 = vmatpush1.msra.mxu0 0.0
    %207 = vmatprep.subr.mxu0 0.0
    %208 = vmatpush1.msra.mxu0 0.0
    %209 = vmatprep.subr.mxu0 0.0
    %210 = vmatpush1.msra.mxu0 0.0
    %211 = vmatprep.subr.mxu0 0.0
    %212 = vmatpush1.msra.mxu0 0.0
    %213 = vmatprep.subr.mxu0 0.0
    %214 = vmatpush1.msra.mxu0 0.0
    %215 = vmatprep.subr.mxu0 0.0
    %216 = vmatpush1.msra.mxu0 0.0
    %217 = vmatprep.subr.mxu0 0.0
    %218 = vmatpush1.msra.mxu0 0.0
    %219 = vmatprep.subr.mxu0 0.0
    %220 = vmatpush1.msra.mxu0 0.0
    %221 = vmatprep.subr.mxu0 0.0
    %222 = vmatpush1.msra.mxu0 0.0
    %223 = vmatprep.mubr.f32.mxu0 0.0
    %224 = vmatmul.mubr.f32.gmra.mrb[0].mxu0 %v157
    %v225 = vpop.f32.mrb[0].mxu0
    %v226 = vadd.f32 0.0, %v225
    %v227 = vpop.f32.mrb[0].mxu0
    %228 = vdwg.mxu0
    %v229 = vld [vmem:[#allocation7] sm:$0xff]
    %v230 = vld [vmem:[#allocation7 + $0x8] sm:$0xff]
    %v231 = vld [vmem:[#allocation7 + $0x10] sm:$0xff]
    %v232 = vld [vmem:[#allocation7 + $0x18] sm:$0xff]
    %v233 = vld [vmem:[#allocation7 + $0x20] sm:$0xff]
    %v234 = vld [vmem:[#allocation7 + $0x28] sm:$0xff]
    %v235 = vld [vmem:[#allocation7 + $0x30] sm:$0xff]
    %v236 = vld [vmem:[#allocation7 + $0x38] sm:$0xff]
    %v237 = vld [vmem:[#allocation7 + $0x40] sm:$0xff]
    %v238 = vld [vmem:[#allocation7 + $0x48] sm:$0xff]
    %v239 = vld [vmem:[#allocation7 + $0x50] sm:$0xff]
    %v240 = vld [vmem:[#allocation7 + $0x58] sm:$0xff]
    %v241 = vld [vmem:[#allocation7 + $0x60] sm:$0xff]
    %v242 = vld [vmem:[#allocation7 + $0x68] sm:$0xff]
    %v243 = vld [vmem:[#allocation7 + $0x70] sm:$0xff]
    %v244 = vld [vmem:[#allocation7 + $0x78] sm:$0xff]
    %v245 = vld [vmem:[%s5] sm:$0x1]
    %v247 = vlaneseq
    %v248 = vshrl.u32 %v247, 7
    %v249 = vsub.s32 0, %v248
    %v250 = vrot.slane %v245, %v249
    %252 = vmatprep.subr.mxu0 0.0
    %253 = vmatpush1.msra.mxu0 %v229
    %254 = vmatprep.subr.mxu0 0.0
    %255 = vmatpush1.msra.mxu0 %v230
    %256 = vmatprep.subr.mxu0 0.0
    %257 = vmatpush1.msra.mxu0 %v231
    %258 = vmatprep.subr.mxu0 0.0
    %259 = vmatpush1.msra.mxu0 %v232
    %260 = vmatprep.subr.mxu0 0.0
    %261 = vmatpush1.msra.mxu0 %v233
    %262 = vmatprep.subr.mxu0 0.0
    %263 = vmatpush1.msra.mxu0 %v234
    %264 = vmatprep.subr.mxu0 0.0
    %265 = vmatpush1.msra.mxu0 %v235
    %266 = vmatprep.subr.mxu0 0.0
    %267 = vmatpush1.msra.mxu0 %v236
    %268 = vmatprep.subr.mxu0 0.0
    %269 = vmatpush1.msra.mxu0 %v237
    %270 = vmatprep.subr.mxu0 0.0
    %271 = vmatpush1.msra.mxu0 %v238
    %272 = vmatprep.subr.mxu0 0.0
    %273 = vmatpush1.msra.mxu0 %v239
    %274 = vmatprep.subr.mxu0 0.0
    %275 = vmatpush1.msra.mxu0 %v240
    %276 = vmatprep.subr.mxu0 0.0
    %277 = vmatpush1.msra.mxu0 %v241
    %278 = vmatprep.subr.mxu0 0.0
    %279 = vmatpush1.msra.mxu0 %v242
    %280 = vmatprep.subr.mxu0 0.0
    %281 = vmatpush1.msra.mxu0 %v243
    %282 = vmatprep.subr.mxu0 0.0
    %283 = vmatpush1.msra.mxu0 %v244
    %284 = vmatprep.subr.mxu0 0.0
    %285 = vmatpush1.msra.mxu0 0.0
    %286 = vmatprep.subr.mxu0 0.0
    %287 = vmatpush1.msra.mxu0 0.0
    %288 = vmatprep.subr.mxu0 0.0
    %289 = vmatpush1.msra.mxu0 0.0
    %290 = vmatprep.subr.mxu0 0.0
    %291 = vmatpush1.msra.mxu0 0.0
    %292 = vmatprep.subr.mxu0 0.0
    %293 = vmatpush1.msra.mxu0 0.0
    %294 = vmatprep.subr.mxu0 0.0
    %295 = vmatpush1.msra.mxu0 0.0
    %296 = vmatprep.subr.mxu0 0.0
    %297 = vmatpush1.msra.mxu0 0.0
    %298 = vmatprep.subr.mxu0 0.0
    %299 = vmatpush1.msra.mxu0 0.0
    %300 = vmatprep.subr.mxu0 0.0
    %301 = vmatpush1.msra.mxu0 0.0
    %302 = vmatprep.subr.mxu0 0.0
    %303 = vmatpush1.msra.mxu0 0.0
    %304 = vmatprep.subr.mxu0 0.0
    %305 = vmatpush1.msra.mxu0 0.0
    %306 = vmatprep.subr.mxu0 0.0
    %307 = vmatpush1.msra.mxu0 0.0
    %308 = vmatprep.subr.mxu0 0.0
    %309 = vmatpush1.msra.mxu0 0.0
    %310 = vmatprep.subr.mxu0 0.0
    %311 = vmatpush1.msra.mxu0 0.0
    %312 = vmatprep.subr.mxu0 0.0
    %313 = vmatpush1.msra.mxu0 0.0
    %314 = vmatprep.subr.mxu0 0.0
    %315 = vmatpush1.msra.mxu0 0.0
    %316 = vmatprep.mubr.f32.mxu0 0.0
    %317 = vmatmul.mubr.f32.gmra.mrb[0].mxu0 %v226
    %v318 = vpop.f32.mrb[0].mxu0
    %v319 = vadd.f32 %v250, %v318
    %v320 = vpop.f32.mrb[0].mxu0
    %321 = vdwg.mxu0
    %322 = vmax.xlane.f32.xlu0 %v319
    %v323 = vpop.xlane.xlu0 %322
    %v324 = vsub.f32 %v319, %v323
    %v325 = vmul.f32 %v324, 1.442695
    %v326 = vpow.pop %v325
    %327 = vadd.xlane.f32.xlu0 %v326
    %v328 = vpop.xlane.xlu0 %327
    %v329 = vrcp.pop %v328
    %v330 = vmul.f32 %v326, %v329
    %331 = vst [vmem:[#allocation8] sm:$0xff] %v330
    // Predicated region
    $region38: #{tpu_custom_call.1} parent=1 // pred_check
      _
    $region39: #{tpu_custom_call.1} parent=1 // pred_check_branch
      %333 = sbr.rel (0) target = $region41
    $region40: #{tpu_custom_call.1} parent=1 // pred_region
      %s335 = ssub.s32 128, 128
      %336 = vsyncadd [#allocation4], %s335
      %s338 = sshll.u32 [#allocation8], 4
      %s339 = int_to_ptr.vmem [resolvable:$true] %s338
      %341 = dma.vmem_to_hbm [thread:$0]  %s339, 128, %s6, [#allocation4]
    $region41: #{tpu_custom_call.1} parent=1 // pred_fallthru
      _
    // Predicated region
    $region42: #{tpu_custom_call.1} parent=1 // pred_check
      _
    $region43: #{tpu_custom_call.1} parent=1 // pred_check_branch
      %343 = sbr.rel (0) target = $region45
    $region44: #{tpu_custom_call.1} parent=1 // pred_region
      %344 = dma.done [#allocation4], 128
    $region45: #{tpu_custom_call.1} parent=1 // pred_fallthru
      _
    %345 = vsyncpa [#allocation3], 1
    %346 = vsyncpa [#allocation6], 1
    %347 = vsyncpa [#allocation4], 1

</llo_original>
